<compile_context>
chip_gen: v7x
topology: tpu7x:2x2x1
jax: 0.10.0
libtpu: 0.0.40
codegen_flags: <defaults>
</compile_context>

<pallas_src>
import jax
import jax.numpy as jnp
import numpy as np
from jax import lax
from jax.experimental import pallas as pl
from jax.experimental.pallas import tpu as pltpu


def conv_layer_kernel(x_ref, w_ref, b_ref, o_ref):
    """Processes one batch element.

    x_ref: (1, n + 2*pad, kf)   padded input window (bf16 or f32)
    w_ref: (K, kf_in, kf_out)   per-tap weight matrices (bf16 or f32)
    b_ref: (1, kf_out)          bias (f32)
    o_ref: (1, n, kf_out)       output (x dtype)
    """
    K = w_ref.shape[0]
    n = o_ref.shape[1]
    kf_out = o_ref.shape[2]

    acc = jnp.zeros((n, kf_out), jnp.float32)
    # Static unrolled tap loop: K independent (n, kf) x (kf, kf) matmuls,
    # all visible to the LLO scheduler so they interleave with each other
    # and with the DMA of the next batch block.  Accumulate in f32.
    for j in range(K):
        acc += jnp.dot(x_ref[0, pl.ds(j, n), :], w_ref[j],
                       preferred_element_type=jnp.float32)
    acc = acc + b_ref[...]                       # bias broadcast (f32, VPU)
    o_ref[0, :, :] = jnp.maximum(acc, 0.0).astype(o_ref.dtype)


def conv_layer_forward(x, weight, bias, kernel_size=7, use_bf16_mxu=True):
    """x: (b, n, k) float32. weight: (k_out, k_in, K) (PyTorch Conv1d layout).
    bias: (k_out,). Returns (b, n, k_out)."""
    b, n, kf = x.shape
    K = kernel_size
    pad = (K - 1) // 2
    # NOTE: symmetric pad reproduces ConstantPad1d + same-length output only
    # for odd kernel_size (the module's intended configuration).

    mxu_dtype = jnp.bfloat16 if use_bf16_mxu else jnp.float32

    # The only wrapper-side data movement: one small pad of the time axis.
    x_pad = jnp.pad(x, ((0, 0), (pad, pad), (0, 0))).astype(mxu_dtype)
    # PyTorch Conv1d weight (out, in, K) -> per-tap (K, in, out) so that
    # x_window[t + j, ci] contracts against weight[co, ci, j].
    w_taps = jnp.transpose(weight, (2, 1, 0)).astype(mxu_dtype)
    b2 = bias.reshape(1, kf).astype(jnp.float32)

    n_padded = n + 2 * pad

    # TODO(synk): for very large n, additionally tile the time axis with a
    # halo'd manual DMA (memory_space=pl.ANY + make_async_copy) to bound the
    # per-step VMEM footprint (relevant mainly for v7x's 64 MiB VMEM).
    out = pl.pallas_call(
        conv_layer_kernel,
        out_shape=jax.ShapeDtypeStruct((b, n, kf), x.dtype),
        grid=(b,),
        in_specs=[
            # per-batch padded window
            pl.BlockSpec((1, n_padded, kf), lambda i: (i, 0, 0)),
            # weights / bias: constant index map -> stay resident in VMEM
            pl.BlockSpec((K, kf, kf), lambda i: (0, 0, 0)),
            pl.BlockSpec((1, kf), lambda i: (0, 0)),
        ],
        out_specs=pl.BlockSpec((1, n, kf), lambda i: (i, 0, 0)),
        compiler_params=pltpu.CompilerParams(
            dimension_semantics=("parallel",)),
    )(x_pad, w_taps, b2)

    return out


def conv_layer_reference(x, weight, bias, kernel_size=7):
    """Pure-JAX reference matching nn.Conv1d + ConstantPad1d + ReLU."""
    pad = (kernel_size - 1) // 2
    x_nck = jnp.transpose(x, (0, 2, 1))                        # (b, k, n)
    x_nck = jnp.pad(x_nck, ((0, 0), (0, 0), (pad, pad)))
    y = lax.conv_general_dilated(
        x_nck, weight, window_strides=(1,), padding="VALID",
        dimension_numbers=("NCH", "OIH", "NCH"),
        precision=lax.Precision.HIGHEST)
    y = y + bias[None, :, None]
    y = jnp.maximum(y, 0.0)
    return jnp.transpose(y, (0, 2, 1))                          # (b, n, k)


if __name__ == "__main__":
    # Small shapes implied by the forward: batch=2, window=16, features=8.
    b, n, kf = 2, 16, 8
    K = 7

    key = jax.random.PRNGKey(0)
    kx, kw, kb = jax.random.split(key, 3)

    x = jax.random.normal(kx, (b, n, kf), dtype=jnp.float32)
    # Deterministic Conv1d-style init (uniform in +/- 1/sqrt(fan_in)).
    bound = 1.0 / np.sqrt(kf * K)
    weight = jax.random.uniform(kw, (kf, kf, K), jnp.float32, -bound, bound)
    bias = jax.random.uniform(kb, (kf,), jnp.float32, -bound, bound)

    ref = jax.block_until_ready(
        conv_layer_reference(x, weight, bias, kernel_size=K))

    # Full-f32 path: faithful to the PyTorch module's numerics.
    out_f32 = jax.block_until_ready(
        conv_layer_forward(x, weight, bias, kernel_size=K, use_bf16_mxu=False))
    assert out_f32.shape == (b, n, kf), out_f32.shape
    np.testing.assert_allclose(np.asarray(out_f32), np.asarray(ref),
                               atol=1e-4, rtol=1e-4)

    # Default fast path: bf16 MXU operands, f32 accumulation / elementwise.
    out_bf16 = jax.block_until_ready(
        conv_layer_forward(x, weight, bias, kernel_size=K, use_bf16_mxu=True))
    np.testing.assert_allclose(np.asarray(out_bf16), np.asarray(ref),
                               atol=2e-2, rtol=2e-2)

    print("KERNEL_OK")
</pallas_src>

<mosaic_0001>
module attributes {stable_mosaic.version = 11 : i64} {
  func.func @conv_layer_kernel(%arg0: i32, %arg1: memref<1x22x8xf32, #tpu.memory_space<vmem>>, %arg2: memref<7x8x8xf32, #tpu.memory_space<vmem>>, %arg3: memref<1x8xf32, #tpu.memory_space<vmem>>, %arg4: memref<1x16x8xf32, #tpu.memory_space<vmem>>) attributes {dimension_semantics = [#tpu.dimension_semantics<parallel>], iteration_bounds = array<i64: 2>, scalar_prefetch = 0 : i64, scratch_operands = 0 : i64, tpu.core_type = #tpu.core_type<tc>, window_params = [{transform_indices = @transform_0, window_bounds = array<i64: 1, 22, 8>}, {pipeline_mode = #tpu.pipeline_mode<synchronous>, transform_indices = @transform_1, window_bounds = array<i64: 7, 8, 8>}, {pipeline_mode = #tpu.pipeline_mode<synchronous>, transform_indices = @transform_2, window_bounds = array<i64: 1, 8>}, {transform_indices = @transform_3, window_bounds = array<i64: 1, 16, 8>}]} {
    %cst = arith.constant 0.000000e+00 : f32
    %0 = vector.broadcast %cst : f32 to vector<16x8xf32>
    %c0 = arith.constant 0 : index
    %c0_0 = arith.constant 0 : index
    %c0_1 = arith.constant 0 : index
    %1 = vector.load %arg1[%c0, %c0_0, %c0_1] : memref<1x22x8xf32, #tpu.memory_space<vmem>>, vector<1x16x8xf32>
    %2 = vector.shape_cast %1 : vector<1x16x8xf32> to vector<16x8xf32>
    %c0_2 = arith.constant 0 : index
    %c0_3 = arith.constant 0 : index
    %c0_4 = arith.constant 0 : index
    %3 = vector.load %arg2[%c0_2, %c0_3, %c0_4] : memref<7x8x8xf32, #tpu.memory_space<vmem>>, vector<1x8x8xf32>
    %4 = vector.shape_cast %3 : vector<1x8x8xf32> to vector<8x8xf32>
    %cst_5 = arith.constant dense<0.000000e+00> : vector<16x8xf32>
    %5 = tpu.matmul %2, %4, %cst_5 {dimension_numbers = #tpu.dot_dimension_numbers<[1], [0], [0], [1], [0, 0, 1, 1], [], []>} : vector<16x8xf32>, vector<8x8xf32>, vector<16x8xf32> -> vector<16x8xf32>
    %6 = arith.addf %0, %5 : vector<16x8xf32>
    %c0_6 = arith.constant 0 : index
    %c1 = arith.constant 1 : index
    %c0_7 = arith.constant 0 : index
    %7 = vector.load %arg1[%c0_6, %c1, %c0_7] : memref<1x22x8xf32, #tpu.memory_space<vmem>>, vector<1x16x8xf32>
    %8 = vector.shape_cast %7 : vector<1x16x8xf32> to vector<16x8xf32>
    %c1_8 = arith.constant 1 : index
    %c0_9 = arith.constant 0 : index
    %c0_10 = arith.constant 0 : index
    %9 = vector.load %arg2[%c1_8, %c0_9, %c0_10] : memref<7x8x8xf32, #tpu.memory_space<vmem>>, vector<1x8x8xf32>
    %10 = vector.shape_cast %9 : vector<1x8x8xf32> to vector<8x8xf32>
    %cst_11 = arith.constant dense<0.000000e+00> : vector<16x8xf32>
    %11 = tpu.matmul %8, %10, %cst_11 {dimension_numbers = #tpu.dot_dimension_numbers<[1], [0], [0], [1], [0, 0, 1, 1], [], []>} : vector<16x8xf32>, vector<8x8xf32>, vector<16x8xf32> -> vector<16x8xf32>
    %12 = arith.addf %6, %11 : vector<16x8xf32>
    %c0_12 = arith.constant 0 : index
    %c2 = arith.constant 2 : index
    %c0_13 = arith.constant 0 : index
    %13 = vector.load %arg1[%c0_12, %c2, %c0_13] : memref<1x22x8xf32, #tpu.memory_space<vmem>>, vector<1x16x8xf32>
    %14 = vector.shape_cast %13 : vector<1x16x8xf32> to vector<16x8xf32>
    %c2_14 = arith.constant 2 : index
    %c0_15 = arith.constant 0 : index
    %c0_16 = arith.constant 0 : index
    %15 = vector.load %arg2[%c2_14, %c0_15, %c0_16] : memref<7x8x8xf32, #tpu.memory_space<vmem>>, vector<1x8x8xf32>
    %16 = vector.shape_cast %15 : vector<1x8x8xf32> to vector<8x8xf32>
    %cst_17 = arith.constant dense<0.000000e+00> : vector<16x8xf32>
    %17 = tpu.matmul %14, %16, %cst_17 {dimension_numbers = #tpu.dot_dimension_numbers<[1], [0], [0], [1], [0, 0, 1, 1], [], []>} : vector<16x8xf32>, vector<8x8xf32>, vector<16x8xf32> -> vector<16x8xf32>
    %18 = arith.addf %12, %17 : vector<16x8xf32>
    %c0_18 = arith.constant 0 : index
    %c3 = arith.constant 3 : index
    %c0_19 = arith.constant 0 : index
    %19 = vector.load %arg1[%c0_18, %c3, %c0_19] : memref<1x22x8xf32, #tpu.memory_space<vmem>>, vector<1x16x8xf32>
    %20 = vector.shape_cast %19 : vector<1x16x8xf32> to vector<16x8xf32>
    %c3_20 = arith.constant 3 : index
    %c0_21 = arith.constant 0 : index
    %c0_22 = arith.constant 0 : index
    %21 = vector.load %arg2[%c3_20, %c0_21, %c0_22] : memref<7x8x8xf32, #tpu.memory_space<vmem>>, vector<1x8x8xf32>
    %22 = vector.shape_cast %21 : vector<1x8x8xf32> to vector<8x8xf32>
    %cst_23 = arith.constant dense<0.000000e+00> : vector<16x8xf32>
    %23 = tpu.matmul %20, %22, %cst_23 {dimension_numbers = #tpu.dot_dimension_numbers<[1], [0], [0], [1], [0, 0, 1, 1], [], []>} : vector<16x8xf32>, vector<8x8xf32>, vector<16x8xf32> -> vector<16x8xf32>
    %24 = arith.addf %18, %23 : vector<16x8xf32>
    %c0_24 = arith.constant 0 : index
    %c4 = arith.constant 4 : index
    %c0_25 = arith.constant 0 : index
    %25 = vector.load %arg1[%c0_24, %c4, %c0_25] : memref<1x22x8xf32, #tpu.memory_space<vmem>>, vector<1x16x8xf32>
    %26 = vector.shape_cast %25 : vector<1x16x8xf32> to vector<16x8xf32>
    %c4_26 = arith.constant 4 : index
    %c0_27 = arith.constant 0 : index
    %c0_28 = arith.constant 0 : index
    %27 = vector.load %arg2[%c4_26, %c0_27, %c0_28] : memref<7x8x8xf32, #tpu.memory_space<vmem>>, vector<1x8x8xf32>
    %28 = vector.shape_cast %27 : vector<1x8x8xf32> to vector<8x8xf32>
    %cst_29 = arith.constant dense<0.000000e+00> : vector<16x8xf32>
    %29 = tpu.matmul %26, %28, %cst_29 {dimension_numbers = #tpu.dot_dimension_numbers<[1], [0], [0], [1], [0, 0, 1, 1], [], []>} : vector<16x8xf32>, vector<8x8xf32>, vector<16x8xf32> -> vector<16x8xf32>
    %30 = arith.addf %24, %29 : vector<16x8xf32>
    %c0_30 = arith.constant 0 : index
    %c5 = arith.constant 5 : index
    %c0_31 = arith.constant 0 : index
    %31 = vector.load %arg1[%c0_30, %c5, %c0_31] : memref<1x22x8xf32, #tpu.memory_space<vmem>>, vector<1x16x8xf32>
    %32 = vector.shape_cast %31 : vector<1x16x8xf32> to vector<16x8xf32>
    %c5_32 = arith.constant 5 : index
    %c0_33 = arith.constant 0 : index
    %c0_34 = arith.constant 0 : index
    %33 = vector.load %arg2[%c5_32, %c0_33, %c0_34] : memref<7x8x8xf32, #tpu.memory_space<vmem>>, vector<1x8x8xf32>
    %34 = vector.shape_cast %33 : vector<1x8x8xf32> to vector<8x8xf32>
    %cst_35 = arith.constant dense<0.000000e+00> : vector<16x8xf32>
    %35 = tpu.matmul %32, %34, %cst_35 {dimension_numbers = #tpu.dot_dimension_numbers<[1], [0], [0], [1], [0, 0, 1, 1], [], []>} : vector<16x8xf32>, vector<8x8xf32>, vector<16x8xf32> -> vector<16x8xf32>
    %36 = arith.addf %30, %35 : vector<16x8xf32>
    %c0_36 = arith.constant 0 : index
    %c6 = arith.constant 6 : index
    %c0_37 = arith.constant 0 : index
    %37 = vector.load %arg1[%c0_36, %c6, %c0_37] : memref<1x22x8xf32, #tpu.memory_space<vmem>>, vector<1x16x8xf32>
    %38 = vector.shape_cast %37 : vector<1x16x8xf32> to vector<16x8xf32>
    %c6_38 = arith.constant 6 : index
    %c0_39 = arith.constant 0 : index
    %c0_40 = arith.constant 0 : index
    %39 = vector.load %arg2[%c6_38, %c0_39, %c0_40] : memref<7x8x8xf32, #tpu.memory_space<vmem>>, vector<1x8x8xf32>
    %40 = vector.shape_cast %39 : vector<1x8x8xf32> to vector<8x8xf32>
    %cst_41 = arith.constant dense<0.000000e+00> : vector<16x8xf32>
    %41 = tpu.matmul %38, %40, %cst_41 {dimension_numbers = #tpu.dot_dimension_numbers<[1], [0], [0], [1], [0, 0, 1, 1], [], []>} : vector<16x8xf32>, vector<8x8xf32>, vector<16x8xf32> -> vector<16x8xf32>
    %42 = arith.addf %36, %41 : vector<16x8xf32>
    %c0_42 = arith.constant 0 : index
    %c0_43 = arith.constant 0 : index
    %43 = vector.load %arg3[%c0_42, %c0_43] : memref<1x8xf32, #tpu.memory_space<vmem>>, vector<1x8xf32>
    %44 = vector.broadcast %43 : vector<1x8xf32> to vector<16x8xf32>
    %45 = arith.addf %42, %44 : vector<16x8xf32>
    %cst_44 = arith.constant 0.000000e+00 : f32
    %46 = vector.broadcast %cst_44 : f32 to vector<16x8xf32>
    %47 = arith.maximumf %45, %46 : vector<16x8xf32>
    %c0_45 = arith.constant 0 : index
    %c0_46 = arith.constant 0 : index
    %c0_47 = arith.constant 0 : index
    %48 = vector.load %arg4[%c0_45, %c0_46, %c0_47] : memref<1x16x8xf32, #tpu.memory_space<vmem>>, vector<1x16x8xf32>
    %49 = vector.shape_cast %48 : vector<1x16x8xf32> to vector<16x8xf32>
    %50 = vector.shape_cast %47 : vector<16x8xf32> to vector<1x16x8xf32>
    tpu.vector_store %arg4[%c0_45, %c0_46, %c0_47], %50 {strides = array<i32>} : memref<1x16x8xf32, #tpu.memory_space<vmem>>, vector<1x16x8xf32>,
    return
  }
  func.func @transform_0(%arg0: i32) -> (i32, i32, i32) {
    %c0_i32 = arith.constant 0 : i32
    %c0_i32_0 = arith.constant 0 : i32
    %c0_i32_1 = arith.constant 0 : i32
    return %arg0, %c0_i32, %c0_i32_0 : i32, i32, i32
  }
  func.func @transform_1(%arg0: i32) -> (i32, i32, i32) {
    %c0_i32 = arith.constant 0 : i32
    %c0_i32_0 = arith.constant 0 : i32
    %c0_i32_1 = arith.constant 0 : i32
    %c0_i32_2 = arith.constant 0 : i32
    return %c0_i32, %c0_i32_0, %c0_i32_1 : i32, i32, i32
  }
  func.func @transform_2(%arg0: i32) -> (i32, i32) {
    %c0_i32 = arith.constant 0 : i32
    %c0_i32_0 = arith.constant 0 : i32
    %c0_i32_1 = arith.constant 0 : i32
    return %c0_i32, %c0_i32_0 : i32, i32
  }
  func.func @transform_3(%arg0: i32) -> (i32, i32, i32) {
    %c0_i32 = arith.constant 0 : i32
    %c0_i32_0 = arith.constant 0 : i32
    %c0_i32_1 = arith.constant 0 : i32
    return %arg0, %c0_i32, %c0_i32_0 : i32, i32, i32
  }
}

</mosaic_0001>

<llo_original>
// kernel: tpu_custom_call.1
$region0: #{tpu_custom_call.1}
  #allocation0 [shape = 'u32[]', space=smem, size = 0x4, offset = 0x4, fixed_abs, tag = 'smem constant byte address 0x4 - core index']
  #allocation1 [shape = 'u32[144,128]{1,0:T(1,128)}', space=vmem, size = 0x12000, scoped, tag = 'internal scratch']
  %s0 = inlined_call_operand.vmem [shape: f32[2,22,8], index: 0, kind: input, shape index: {}]
  %s1 = inlined_call_operand.vmem [shape: f32[7,8,8], index: 1, kind: input, shape index: {}]
  %s2 = inlined_call_operand.vmem [shape: f32[1,8], index: 2, kind: input, shape index: {}]
  %s3 = inlined_call_operand.vmem [shape: f32[2,16,8], index: 3, kind: output, shape index: {}]
  %s4 = sld [smem:[#allocation0]]
  $region45: #{tpu_custom_call.1} parent=0
    _
  %s6 = ssub.s32 1, %s4
  %s7 = scalar_select 0, %s6, %s4
  loop: start=0, step=1, limit=4
  $region2: #{tpu_custom_call.1} parent=0 // loop_pre_header
    _
  $region3: #{tpu_custom_call.1} parent=0 // loop_header
    %s9 = sphi 0, %s13
    %p10 = scmp.ge.s32.totalorder %s9, 4
    %s19 = sphi 0, %s21
    %s22 = sphi 0, %s19
    %s23 = sphi 0, %s22
    %s39 = sphi 0, %s23
    %s43 = sphi 0, %s43
    %s45 = sphi 0, %s43
    %s46 = sphi 0, %s45
    %s60 = sphi 0, %s46
    %s64 = sphi 0, %s64
    %s66 = sphi 0, %s64
    %s67 = sphi 0, %s66
    %s81 = sphi 0, %s67
    %s87 = sphi 0, %s89
    %s90 = sphi 0, %s87
    %s91 = sphi 0, %s90
    %s107 = sphi 0, %s91
  $region4: #{tpu_custom_call.1} parent=0 // loop_header_branch
    %12 = sbr.rel (%p10) target = $region8
  $region5: #{tpu_custom_call.1} parent=0 // loop_body
    %s14 = ssub.s32 %s9, 1
    %s15 = ssub.s32 %s9, 2
    %s16 = sadd.s32 %s9, 1
    %s17 = ssub.s32 %s9, %s16
    %p18 = scmp.eq.s32.totalorder %s17, 0
    %s20 = sadd.s32 %s19, 1
    %s21 = scalar_select %p18, %s19, %s20
    %p24 = pneg %p18
    %p25 = scmp.eq.s32.totalorder %s9, 1
    %p26 = por %p24, %p25
    %p27 = scmp.ne.s32.totalorder %s19, %s22
    %p28 = scmp.eq.s32.totalorder %s9, 0
    %p29 = por %p27, %p28
    %p30 = scmp.ne.s32.totalorder %s19, %s22
    %p31 = scmp.eq.s32.totalorder %s14, 1
    %p32 = por %p30, %p31
    %p33 = scmp.ne.s32.totalorder %s22, %s23
    %p34 = scmp.eq.s32.totalorder %s14, 0
    %p35 = por %p33, %p34
    %p36 = scmp.ne.s32.totalorder %s22, %s23
    %p37 = scmp.eq.s32.totalorder %s15, 1
    %p38 = por %p36, %p37
    %p40 = scmp.ne.s32.totalorder %s23, %s39
    %p41 = scmp.eq.s32.totalorder %s15, 0
    %p42 = por %p40, %p41
    %s44 = sadd.s32 %s43, 1
    %p47 = scmp.eq.s32.totalorder %s9, 1
    %p48 = scmp.ne.s32.totalorder %s43, %s45
    %p49 = scmp.eq.s32.totalorder %s9, 0
    %p50 = por %p48, %p49
    %p51 = scmp.ne.s32.totalorder %s43, %s45
    %p52 = scmp.eq.s32.totalorder %s14, 1
    %p53 = por %p51, %p52
    %p54 = scmp.ne.s32.totalorder %s45, %s46
    %p55 = scmp.eq.s32.totalorder %s14, 0
    %p56 = por %p54, %p55
    %p57 = scmp.ne.s32.totalorder %s45, %s46
    %p58 = scmp.eq.s32.totalorder %s15, 1
    %p59 = por %p57, %p58
    %p61 = scmp.ne.s32.totalorder %s46, %s60
    %p62 = scmp.eq.s32.totalorder %s15, 0
    %p63 = por %p61, %p62
    %s65 = sadd.s32 %s64, 1
    %p68 = scmp.eq.s32.totalorder %s9, 1
    %p69 = scmp.ne.s32.totalorder %s64, %s66
    %p70 = scmp.eq.s32.totalorder %s9, 0
    %p71 = por %p69, %p70
    %p72 = scmp.ne.s32.totalorder %s64, %s66
    %p73 = scmp.eq.s32.totalorder %s14, 1
    %p74 = por %p72, %p73
    %p75 = scmp.ne.s32.totalorder %s66, %s67
    %p76 = scmp.eq.s32.totalorder %s14, 0
    %p77 = por %p75, %p76
    %p78 = scmp.ne.s32.totalorder %s66, %s67
    %p79 = scmp.eq.s32.totalorder %s15, 1
    %p80 = por %p78, %p79
    %p82 = scmp.ne.s32.totalorder %s67, %s81
    %p83 = scmp.eq.s32.totalorder %s15, 0
    %p84 = por %p82, %p83
    %s85 = ssub.s32 %s9, %s16
    %p86 = scmp.eq.s32.totalorder %s85, 0
    %s88 = sadd.s32 %s87, 1
    %s89 = scalar_select %p86, %s87, %s88
    %p92 = pneg %p86
    %p93 = scmp.eq.s32.totalorder %s9, 1
    %p94 = por %p92, %p93
    %p95 = scmp.ne.s32.totalorder %s87, %s90
    %p96 = scmp.eq.s32.totalorder %s9, 0
    %p97 = por %p95, %p96
    %p98 = scmp.ne.s32.totalorder %s87, %s90
    %p99 = scmp.eq.s32.totalorder %s14, 1
    %p100 = por %p98, %p99
    %p101 = scmp.ne.s32.totalorder %s90, %s91
    %p102 = scmp.eq.s32.totalorder %s14, 0
    %p103 = por %p101, %p102
    %p104 = scmp.ne.s32.totalorder %s90, %s91
    %p105 = scmp.eq.s32.totalorder %s15, 1
    %p106 = por %p104, %p105
    %p108 = scmp.ne.s32.totalorder %s91, %s107
    %p109 = scmp.eq.s32.totalorder %s15, 0
    %p110 = por %p108, %p109
    %p111 = scmp.le.s32.totalorder 1, %s9
    %p112 = scmp.lt.s32.totalorder %s9, 3
    %p113 = pnand %p111, %p112
    %p114 = pneg %p113
    // Predicated region
    $region9: #{tpu_custom_call.1} parent=5 // pred_check
      _
    $region10: #{tpu_custom_call.1} parent=5 // pred_check_branch
      %116 = sbr.rel (%p113) target = $region12
    $region11: #{tpu_custom_call.1} parent=5 // pred_region
      %s117 = ssub.s32 %s9, 1
      // Predicated region
      $region13: #{tpu_custom_call.1} parent=11 // pred_check
        %p118 = pneg %p56
      $region14: #{tpu_custom_call.1} parent=11 // pred_check_branch
        %120 = sbr.rel (%p118) target = $region16
      $region15: #{tpu_custom_call.1} parent=11 // pred_region
        _
      $region16: #{tpu_custom_call.1} parent=11 // pred_fallthru
        _
      // Predicated region
      $region17: #{tpu_custom_call.1} parent=11 // pred_check
        %p121 = pneg %p77
      $region18: #{tpu_custom_call.1} parent=11 // pred_check_branch
        %123 = sbr.rel (%p121) target = $region20
      $region19: #{tpu_custom_call.1} parent=11 // pred_region
        _
      $region20: #{tpu_custom_call.1} parent=11 // pred_fallthru
        _
    $region12: #{tpu_custom_call.1} parent=5 // pred_fallthru
      _
    %p124 = scmp.lt.s32.totalorder %s9, 2
    // Predicated region
    $region21: #{tpu_custom_call.1} parent=5 // pred_check
      %p125 = pneg %p124
    $region22: #{tpu_custom_call.1} parent=5 // pred_check_branch
      %127 = sbr.rel (%p125) target = $region24
    $region23: #{tpu_custom_call.1} parent=5 // pred_region
      // Predicated region
      $region25: #{tpu_custom_call.1} parent=23 // pred_check
        %p128 = pneg %p29
      $region26: #{tpu_custom_call.1} parent=23 // pred_check_branch
        %130 = sbr.rel (%p128) target = $region28
      $region27: #{tpu_custom_call.1} parent=23 // pred_region
        %p131 = scmp.lt.s32.totalorder %s9, 1
        %s132 = scalar_select %p131, %s9, 1
        %s133 = smul.addr %s132, 3
        %s134 = smul.addr %s133, 8
        %s135 = scalar_lea.vmem %s0, %s134
      $region28: #{tpu_custom_call.1} parent=23 // pred_fallthru
        _
    $region24: #{tpu_custom_call.1} parent=5 // pred_fallthru
      _
    %p136 = scmp.le.s32.totalorder 1, %s9
    %p137 = scmp.lt.s32.totalorder %s9, 3
    %p138 = pnand %p136, %p137
    %p139 = pneg %p138
    // Predicated region
    $region29: #{tpu_custom_call.1} parent=5 // pred_check
      _
    $region30: #{tpu_custom_call.1} parent=5 // pred_check_branch
      %141 = sbr.rel (%p138) target = $region32
    $region31: #{tpu_custom_call.1} parent=5 // pred_region
      %s142 = ssub.s32 %s9, 1
      %p143 = scmp.lt.s32.totalorder %s14, 1
      %s144 = scalar_select %p143, %s14, 1
      %s145 = smul.addr %s144, 3
      %s146 = smul.addr %s145, 8
      %s147 = scalar_lea.vmem %s0, %s146
      %p148 = pneg %p35
      %p149 = pneg %p32
      %p150 = pneg %p56
      %p151 = pneg %p53
      %p152 = pneg %p77
      %p153 = pneg %p74
      %p154 = pneg %p103
      %p155 = pneg %p100
      %p156 = scmp.lt.s32.totalorder %s14, 1
      %s157 = scalar_select %p156, %s14, 1
      %s158 = smul.addr %s157, 2
      %s159 = smul.addr %s158, 8
      %s160 = scalar_lea.vmem %s3, %s159
      %p161 = scmp.lt.s32.totalorder %s14, 1
      %s162 = scalar_select %p161, %s14, 1
      %s163 = smul.addr %s162, 3
      %s164 = smul.addr %s163, 8
      %s165 = scalar_lea.vmem %s0, %s164
      %p166 = scmp.lt.s32.totalorder %s14, 1
      %s167 = scalar_select %p166, %s14, 1
      %s168 = smul.addr %s167, 2
      %s169 = smul.addr %s168, 8
      %s170 = scalar_lea.vmem %s3, %s169
      %v171 = vld [vmem:[%s165] sm:$0xff]
      %v172 = vld [vmem:[%s165 + $0x8] sm:$0xff]
      %v173 = vld [vmem:[%s1] sm:$0xff]
      %v174 = vld [vmem:[%s165 + $0x1] sm:$0xff]
      %v175 = vld [vmem:[%s165 + $0x9] sm:$0xff]
      %s176 = scalar_lea.vmem %s1, 8
      %v177 = vld [vmem:[%s176] sm:$0xff]
      %vm178 = vcmask 64512
      %v180 = vsel %vm178, %v174, 0
      %v183 = vsel %vm178, %v175, 0
      %185 = vmatprep.subr.mxu0 0.0
      %186 = vmatpush1.msra.mxu0 %v177
      %187 = vmatprep.subr.mxu0 0.0
      %188 = vmatpush1.msra.mxu0 0.0
      %189 = vmatprep.subr.mxu0 0.0
      %190 = vmatpush1.msra.mxu0 0.0
      %191 = vmatprep.subr.mxu0 0.0
      %192 = vmatpush1.msra.mxu0 0.0
      %193 = vmatprep.subr.mxu0 0.0
      %194 = vmatpush1.msra.mxu0 0.0
      %195 = vmatprep.subr.mxu0 0.0
      %196 = vmatpush1.msra.mxu0 0.0
      %197 = vmatprep.subr.mxu0 0.0
      %198 = vmatpush1.msra.mxu0 0.0
      %199 = vmatprep.subr.mxu0 0.0
      %200 = vmatpush1.msra.mxu0 0.0
      %201 = vmatprep.subr.mxu0 0.0
      %202 = vmatpush1.msra.mxu0 0.0
      %203 = vmatprep.subr.mxu0 0.0
      %204 = vmatpush1.msra.mxu0 0.0
      %205 = vmatprep.subr.mxu0 0.0
      %206 = vmatpush1.msra.mxu0 0.0
      %207 = vmatprep.subr.mxu0 0.0
      %208 = vmatpush1.msra.mxu0 0.0
      %209 = vmatprep.subr.mxu0 0.0
      %210 = vmatpush1.msra.mxu0 0.0
      %211 = vmatprep.subr.mxu0 0.0
      %212 = vmatpush1.msra.mxu0 0.0
      %213 = vmatprep.subr.mxu0 0.0
      %214 = vmatpush1.msra.mxu0 0.0
      %215 = vmatprep.subr.mxu0 0.0
      %216 = vmatpush1.msra.mxu0 0.0
      %217 = vmatprep.subr.mxu0 0.0
      %218 = vmatpush1.msra.mxu0 0.0
      %219 = vmatprep.subr.mxu0 0.0
      %220 = vmatpush1.msra.mxu0 0.0
      %221 = vmatprep.subr.mxu0 0.0
      %222 = vmatpush1.msra.mxu0 0.0
      %223 = vmatprep.subr.mxu0 0.0
      %224 = vmatpush1.msra.mxu0 0.0
      %225 = vmatprep.subr.mxu0 0.0
      %226 = vmatpush1.msra.mxu0 0.0
      %227 = vmatprep.subr.mxu0 0.0
      %228 = vmatpush1.msra.mxu0 0.0
      %229 = vmatprep.subr.mxu0 0.0
      %230 = vmatpush1.msra.mxu0 0.0
      %231 = vmatprep.subr.mxu0 0.0
      %232 = vmatpush1.msra.mxu0 0.0
      %233 = vmatprep.subr.mxu0 0.0
      %234 = vmatpush1.msra.mxu0 0.0
      %235 = vmatprep.subr.mxu0 0.0
      %236 = vmatpush1.msra.mxu0 0.0
      %237 = vmatprep.subr.mxu0 0.0
      %238 = vmatpush1.msra.mxu0 0.0
      %239 = vmatprep.subr.mxu0 0.0
      %240 = vmatpush1.msra.mxu0 0.0
      %241 = vmatprep.subr.mxu0 0.0
      %242 = vmatpush1.msra.mxu0 0.0
      %243 = vmatprep.subr.mxu0 0.0
      %244 = vmatpush1.msra.mxu0 0.0
      %245 = vmatprep.subr.mxu0 0.0
      %246 = vmatpush1.msra.mxu0 0.0
      %247 = vmatprep.subr.mxu0 0.0
      %248 = vmatpush1.msra.mxu0 0.0
      %249 = vmatprep.mubr.f32.mxu0 0.0
      %250 = vmatmul.mubr.f32.gmra.mrb[0].mxu0 %v180
      %v251 = vpop.f32.mrb[0].mxu0
      %v252 = vadd.f32 0.0, %v251
      %v253 = vpop.f32.mrb[0].mxu0
      %254 = vmatprep.mubr.f32.mxu0 0.0
      %255 = vmatmul.mubr.f32.gmra.mrb[0].mxu0 %v183
      %v256 = vpop.f32.mrb[0].mxu0
      %v257 = vadd.f32 0.0, %v256
      %v258 = vpop.f32.mrb[0].mxu0
      %259 = vdwg.mxu0
      %v261 = vsel %vm178, %v171, 0
      %v264 = vsel %vm178, %v172, 0
      %266 = vmatprep.subr.mxu0 0.0
      %267 = vmatpush1.msra.mxu0 %v173
      %268 = vmatprep.subr.mxu0 0.0
      %269 = vmatpush1.msra.mxu0 0.0
      %270 = vmatprep.subr.mxu0 0.0
      %271 = vmatpush1.msra.mxu0 0.0
      %272 = vmatprep.subr.mxu0 0.0
      %273 = vmatpush1.msra.mxu0 0.0
      %274 = vmatprep.subr.mxu0 0.0
      %275 = vmatpush1.msra.mxu0 0.0
      %276 = vmatprep.subr.mxu0 0.0
      %277 = vmatpush1.msra.mxu0 0.0
      %278 = vmatprep.subr.mxu0 0.0
      %279 = vmatpush1.msra.mxu0 0.0
      %280 = vmatprep.subr.mxu0 0.0
      %281 = vmatpush1.msra.mxu0 0.0
      %282 = vmatprep.subr.mxu0 0.0
      %283 = vmatpush1.msra.mxu0 0.0
      %284 = vmatprep.subr.mxu0 0.0
      %285 = vmatpush1.msra.mxu0 0.0
      %286 = vmatprep.subr.mxu0 0.0
      %287 = vmatpush1.msra.mxu0 0.0
      %288 = vmatprep.subr.mxu0 0.0
      %289 = vmatpush1.msra.mxu0 0.0
      %290 = vmatprep.subr.mxu0 0.0
      %291 = vmatpush1.msra.mxu0 0.0
      %292 = vmatprep.subr.mxu0 0.0
      %293 = vmatpush1.msra.mxu0 0.0
      %294 = vmatprep.subr.mxu0 0.0
      %295 = vmatpush1.msra.mxu0 0.0
      %296 = vmatprep.subr.mxu0 0.0
      %297 = vmatpush1.msra.mxu0 0.0
      %298 = vmatprep.subr.mxu0 0.0
      %299 = vmatpush1.msra.mxu0 0.0
      %300 = vmatprep.subr.mxu0 0.0
      %301 = vmatpush1.msra.mxu0 0.0
      %302 = vmatprep.subr.mxu0 0.0
      %303 = vmatpush1.msra.mxu0 0.0
      %304 = vmatprep.subr.mxu0 0.0
      %305 = vmatpush1.msra.mxu0 0.0
      %306 = vmatprep.subr.mxu0 0.0
      %307 = vmatpush1.msra.mxu0 0.0
      %308 = vmatprep.subr.mxu0 0.0
      %309 = vmatpush1.msra.mxu0 0.0
      %310 = vmatprep.subr.mxu0 0.0
      %311 = vmatpush1.msra.mxu0 0.0
      %312 = vmatprep.subr.mxu0 0.0
      %313 = vmatpush1.msra.mxu0 0.0
      %314 = vmatprep.subr.mxu0 0.0
      %315 = vmatpush1.msra.mxu0 0.0
      %316 = vmatprep.subr.mxu0 0.0
      %317 = vmatpush1.msra.mxu0 0.0
      %318 = vmatprep.subr.mxu0 0.0
      %319 = vmatpush1.msra.mxu0 0.0
      %320 = vmatprep.subr.mxu0 0.0
      %321 = vmatpush1.msra.mxu0 0.0
      %322 = vmatprep.subr.mxu0 0.0
      %323 = vmatpush1.msra.mxu0 0.0
      %324 = vmatprep.subr.mxu0 0.0
      %325 = vmatpush1.msra.mxu0 0.0
      %326 = vmatprep.subr.mxu0 0.0
      %327 = vmatpush1.msra.mxu0 0.0
      %328 = vmatprep.subr.mxu0 0.0
      %329 = vmatpush1.msra.mxu0 0.0
      %330 = vmatprep.mubr.f32.mxu0 0.0
      %331 = vmatmul.mubr.f32.gmra.mrb[0].mxu0 %v261
      %v332 = vpop.f32.mrb[0].mxu0
      %v333 = vadd.f32 %v252, %v332
      %v334 = vpop.f32.mrb[0].mxu0
      %335 = vmatprep.mubr.f32.mxu0 0.0
      %336 = vmatmul.mubr.f32.gmra.mrb[0].mxu0 %v264
      %v337 = vpop.f32.mrb[0].mxu0
      %v338 = vadd.f32 %v257, %v337
      %v339 = vpop.f32.mrb[0].mxu0
      %340 = vdwg.mxu0
      %v341 = vld [vmem:[%s165 + $0x2] sm:$0xff]
      %v342 = vld [vmem:[%s165 + $0xa] sm:$0xff]
      %s343 = scalar_lea.vmem %s1, 16
      %v344 = vld [vmem:[%s343] sm:$0xff]
      %v346 = vsel %vm178, %v341, 0
      %v349 = vsel %vm178, %v342, 0
      %351 = vmatprep.subr.mxu0 0.0
      %352 = vmatpush1.msra.mxu0 %v344
      %353 = vmatprep.subr.mxu0 0.0
      %354 = vmatpush1.msra.mxu0 0.0
      %355 = vmatprep.subr.mxu0 0.0
      %356 = vmatpush1.msra.mxu0 0.0
      %357 = vmatprep.subr.mxu0 0.0
      %358 = vmatpush1.msra.mxu0 0.0
      %359 = vmatprep.subr.mxu0 0.0
      %360 = vmatpush1.msra.mxu0 0.0
      %361 = vmatprep.subr.mxu0 0.0
      %362 = vmatpush1.msra.mxu0 0.0
      %363 = vmatprep.subr.mxu0 0.0
      %364 = vmatpush1.msra.mxu0 0.0
      %365 = vmatprep.subr.mxu0 0.0
      %366 = vmatpush1.msra.mxu0 0.0
      %367 = vmatprep.subr.mxu0 0.0
      %368 = vmatpush1.msra.mxu0 0.0
      %369 = vmatprep.subr.mxu0 0.0
      %370 = vmatpush1.msra.mxu0 0.0
      %371 = vmatprep.subr.mxu0 0.0
      %372 = vmatpush1.msra.mxu0 0.0
      %373 = vmatprep.subr.mxu0 0.0
      %374 = vmatpush1.msra.mxu0 0.0
      %375 = vmatprep.subr.mxu0 0.0
      %376 = vmatpush1.msra.mxu0 0.0
      %377 = vmatprep.subr.mxu0 0.0
      %378 = vmatpush1.msra.mxu0 0.0
      %379 = vmatprep.subr.mxu0 0.0
      %380 = vmatpush1.msra.mxu0 0.0
      %381 = vmatprep.subr.mxu0 0.0
      %382 = vmatpush1.msra.mxu0 0.0
      %383 = vmatprep.subr.mxu0 0.0
      %384 = vmatpush1.msra.mxu0 0.0
      %385 = vmatprep.subr.mxu0 0.0
      %386 = vmatpush1.msra.mxu0 0.0
      %387 = vmatprep.subr.mxu0 0.0
      %388 = vmatpush1.msra.mxu0 0.0
      %389 = vmatprep.subr.mxu0 0.0
      %390 = vmatpush1.msra.mxu0 0.0
      %391 = vmatprep.subr.mxu0 0.0
      %392 = vmatpush1.msra.mxu0 0.0
      %393 = vmatprep.subr.mxu0 0.0
      %394 = vmatpush1.msra.mxu0 0.0
      %395 = vmatprep.subr.mxu0 0.0
      %396 = vmatpush1.msra.mxu0 0.0
      %397 = vmatprep.subr.mxu0 0.0
      %398 = vmatpush1.msra.mxu0 0.0
      %399 = vmatprep.subr.mxu0 0.0
      %400 = vmatpush1.msra.mxu0 0.0
      %401 = vmatprep.subr.mxu0 0.0
      %402 = vmatpush1.msra.mxu0 0.0
      %403 = vmatprep.subr.mxu0 0.0
      %404 = vmatpush1.msra.mxu0 0.0
      %405 = vmatprep.subr.mxu0 0.0
      %406 = vmatpush1.msra.mxu0 0.0
      %407 = vmatprep.subr.mxu0 0.0
      %408 = vmatpush1.msra.mxu0 0.0
      %409 = vmatprep.subr.mxu0 0.0
      %410 = vmatpush1.msra.mxu0 0.0
      %411 = vmatprep.subr.mxu0 0.0
      %412 = vmatpush1.msra.mxu0 0.0
      %413 = vmatprep.subr.mxu0 0.0
      %414 = vmatpush1.msra.mxu0 0.0
      %415 = vmatprep.mubr.f32.mxu0 0.0
      %416 = vmatmul.mubr.f32.gmra.mrb[0].mxu0 %v346
      %v417 = vpop.f32.mrb[0].mxu0
      %v418 = vadd.f32 0.0, %v417
      %v419 = vpop.f32.mrb[0].mxu0
      %420 = vmatprep.mubr.f32.mxu0 0.0
      %421 = vmatmul.mubr.f32.gmra.mrb[0].mxu0 %v349
      %v422 = vpop.f32.mrb[0].mxu0
      %v423 = vadd.f32 0.0, %v422
      %v424 = vpop.f32.mrb[0].mxu0
      %425 = vdwg.mxu0
      %v426 = vadd.f32 %v333, %v418
      %v427 = vadd.f32 %v338, %v423
      %v428 = vld [vmem:[%s165 + $0x3] sm:$0xff]
      %v429 = vld [vmem:[%s165 + $0xb] sm:$0xff]
      %s430 = scalar_lea.vmem %s1, 24
      %v431 = vld [vmem:[%s430] sm:$0xff]
      %v433 = vsel %vm178, %v428, 0
      %v436 = vsel %vm178, %v429, 0
      %438 = vmatprep.subr.mxu0 0.0
      %439 = vmatpush1.msra.mxu0 %v431
      %440 = vmatprep.subr.mxu0 0.0
      %441 = vmatpush1.msra.mxu0 0.0
      %442 = vmatprep.subr.mxu0 0.0
      %443 = vmatpush1.msra.mxu0 0.0
      %444 = vmatprep.subr.mxu0 0.0
      %445 = vmatpush1.msra.mxu0 0.0
      %446 = vmatprep.subr.mxu0 0.0
      %447 = vmatpush1.msra.mxu0 0.0
      %448 = vmatprep.subr.mxu0 0.0
      %449 = vmatpush1.msra.mxu0 0.0
      %450 = vmatprep.subr.mxu0 0.0
      %451 = vmatpush1.msra.mxu0 0.0
      %452 = vmatprep.subr.mxu0 0.0
      %453 = vmatpush1.msra.mxu0 0.0
      %454 = vmatprep.subr.mxu0 0.0
      %455 = vmatpush1.msra.mxu0 0.0
      %456 = vmatprep.subr.mxu0 0.0
      %457 = vmatpush1.msra.mxu0 0.0
      %458 = vmatprep.subr.mxu0 0.0
      %459 = vmatpush1.msra.mxu0 0.0
      %460 = vmatprep.subr.mxu0 0.0
      %461 = vmatpush1.msra.mxu0 0.0
      %462 = vmatprep.subr.mxu0 0.0
      %463 = vmatpush1.msra.mxu0 0.0
      %464 = vmatprep.subr.mxu0 0.0
      %465 = vmatpush1.msra.mxu0 0.0
      %466 = vmatprep.subr.mxu0 0.0
      %467 = vmatpush1.msra.mxu0 0.0
      %468 = vmatprep.subr.mxu0 0.0
      %469 = vmatpush1.msra.mxu0 0.0
      %470 = vmatprep.subr.mxu0 0.0
      %471 = vmatpush1.msra.mxu0 0.0
      %472 = vmatprep.subr.mxu0 0.0
      %473 = vmatpush1.msra.mxu0 0.0
      %474 = vmatprep.subr.mxu0 0.0
      %475 = vmatpush1.msra.mxu0 0.0
      %476 = vmatprep.subr.mxu0 0.0
      %477 = vmatpush1.msra.mxu0 0.0
      %478 = vmatprep.subr.mxu0 0.0
      %479 = vmatpush1.msra.mxu0 0.0
      %480 = vmatprep.subr.mxu0 0.0
      %481 = vmatpush1.msra.mxu0 0.0
      %482 = vmatprep.subr.mxu0 0.0
      %483 = vmatpush1.msra.mxu0 0.0
      %484 = vmatprep.subr.mxu0 0.0
      %485 = vmatpush1.msra.mxu0 0.0
      %486 = vmatprep.subr.mxu0 0.0
      %487 = vmatpush1.msra.mxu0 0.0
      %488 = vmatprep.subr.mxu0 0.0
      %489 = vmatpush1.msra.mxu0 0.0
      %490 = vmatprep.subr.mxu0 0.0
      %491 = vmatpush1.msra.mxu0 0.0
      %492 = vmatprep.subr.mxu0 0.0
      %493 = vmatpush1.msra.mxu0 0.0
      %494 = vmatprep.subr.mxu0 0.0
      %495 = vmatpush1.msra.mxu0 0.0
      %496 = vmatprep.subr.mxu0 0.0
      %497 = vmatpush1.msra.mxu0 0.0
      %498 = vmatprep.subr.mxu0 0.0
      %499 = vmatpush1.msra.mxu0 0.0
      %500 = vmatprep.subr.mxu0 0.0
      %501 = vmatpush1.msra.mxu0 0.0
      %502 = vmatprep.mubr.f32.mxu0 0.0
      %503 = vmatmul.mubr.f32.gmra.mrb[0].mxu0 %v433
      %v504 = vpop.f32.mrb[0].mxu0
      %v505 = vadd.f32 0.0, %v504
      %v506 = vpop.f32.mrb[0].mxu0
      %507 = vmatprep.mubr.f32.mxu0 0.0
      %508 = vmatmul.mubr.f32.gmra.mrb[0].mxu0 %v436
      %v509 = vpop.f32.mrb[0].mxu0
      %v510 = vadd.f32 0.0, %v509
      %v511 = vpop.f32.mrb[0].mxu0
      %512 = vdwg.mxu0
      %v513 = vadd.f32 %v426, %v505
      %v514 = vadd.f32 %v427, %v510
      %v515 = vld [vmem:[%s165 + $0x4] sm:$0xff]
      %v516 = vld [vmem:[%s165 + $0xc] sm:$0xff]
      %s517 = scalar_lea.vmem %s1, 32
      %v518 = vld [vmem:[%s517] sm:$0xff]
      %v520 = vsel %vm178, %v515, 0
      %v523 = vsel %vm178, %v516, 0
      %525 = vmatprep.subr.mxu0 0.0
      %526 = vmatpush1.msra.mxu0 %v518
      %527 = vmatprep.subr.mxu0 0.0
      %528 = vmatpush1.msra.mxu0 0.0
      %529 = vmatprep.subr.mxu0 0.0
      %530 = vmatpush1.msra.mxu0 0.0
      %531 = vmatprep.subr.mxu0 0.0
      %532 = vmatpush1.msra.mxu0 0.0
      %533 = vmatprep.subr.mxu0 0.0
      %534 = vmatpush1.msra.mxu0 0.0
      %535 = vmatprep.subr.mxu0 0.0
      %536 = vmatpush1.msra.mxu0 0.0
      %537 = vmatprep.subr.mxu0 0.0
      %538 = vmatpush1.msra.mxu0 0.0
      %539 = vmatprep.subr.mxu0 0.0
      %540 = vmatpush1.msra.mxu0 0.0
      %541 = vmatprep.subr.mxu0 0.0
      %542 = vmatpush1.msra.mxu0 0.0
      %543 = vmatprep.subr.mxu0 0.0
      %544 = vmatpush1.msra.mxu0 0.0
      %545 = vmatprep.subr.mxu0 0.0
      %546 = vmatpush1.msra.mxu0 0.0
      %547 = vmatprep.subr.mxu0 0.0
      %548 = vmatpush1.msra.mxu0 0.0
      %549 = vmatprep.subr.mxu0 0.0
      %550 = vmatpush1.msra.mxu0 0.0
      %551 = vmatprep.subr.mxu0 0.0
      %552 = vmatpush1.msra.mxu0 0.0
      %553 = vmatprep.subr.mxu0 0.0
      %554 = vmatpush1.msra.mxu0 0.0
      %555 = vmatprep.subr.mxu0 0.0
      %556 = vmatpush1.msra.mxu0 0.0
      %557 = vmatprep.subr.mxu0 0.0
      %558 = vmatpush1.msra.mxu0 0.0
      %559 = vmatprep.subr.mxu0 0.0
      %560 = vmatpush1.msra.mxu0 0.0
      %561 = vmatprep.subr.mxu0 0.0
      %562 = vmatpush1.msra.mxu0 0.0
      %563 = vmatprep.subr.mxu0 0.0
      %564 = vmatpush1.msra.mxu0 0.0
      %565 = vmatprep.subr.mxu0 0.0
      %566 = vmatpush1.msra.mxu0 0.0
      %567 = vmatprep.subr.mxu0 0.0
      %568 = vmatpush1.msra.mxu0 0.0
      %569 = vmatprep.subr.mxu0 0.0
      %570 = vmatpush1.msra.mxu0 0.0
      %571 = vmatprep.subr.mxu0 0.0
      %572 = vmatpush1.msra.mxu0 0.0
      %573 = vmatprep.subr.mxu0 0.0
      %574 = vmatpush1.msra.mxu0 0.0
      %575 = vmatprep.subr.mxu0 0.0
      %576 = vmatpush1.msra.mxu0 0.0
      %577 = vmatprep.subr.mxu0 0.0
      %578 = vmatpush1.msra.mxu0 0.0
      %579 = vmatprep.subr.mxu0 0.0
      %580 = vmatpush1.msra.mxu0 0.0
      %581 = vmatprep.subr.mxu0 0.0
      %582 = vmatpush1.msra.mxu0 0.0
      %583 = vmatprep.subr.mxu0 0.0
      %584 = vmatpush1.msra.mxu0 0.0
      %585 = vmatprep.subr.mxu0 0.0
      %586 = vmatpush1.msra.mxu0 0.0
      %587 = vmatprep.subr.mxu0 0.0
      %588 = vmatpush1.msra.mxu0 0.0
      %589 = vmatprep.mubr.f32.mxu0 0.0
      %590 = vmatmul.mubr.f32.gmra.mrb[0].mxu0 %v520
      %v591 = vpop.f32.mrb[0].mxu0
      %v592 = vadd.f32 0.0, %v591
      %v593 = vpop.f32.mrb[0].mxu0
      %594 = vmatprep.mubr.f32.mxu0 0.0
      %595 = vmatmul.mubr.f32.gmra.mrb[0].mxu0 %v523
      %v596 = vpop.f32.mrb[0].mxu0
      %v597 = vadd.f32 0.0, %v596
      %v598 = vpop.f32.mrb[0].mxu0
      %599 = vdwg.mxu0
      %v600 = vadd.f32 %v513, %v592
      %v601 = vadd.f32 %v514, %v597
      %v602 = vld [vmem:[%s165 + $0x5] sm:$0xff]
      %v603 = vld [vmem:[%s165 + $0xd] sm:$0xff]
      %s604 = scalar_lea.vmem %s1, 40
      %v605 = vld [vmem:[%s604] sm:$0xff]
      %v607 = vsel %vm178, %v602, 0
      %v610 = vsel %vm178, %v603, 0
      %612 = vmatprep.subr.mxu0 0.0
      %613 = vmatpush1.msra.mxu0 %v605
      %614 = vmatprep.subr.mxu0 0.0
      %615 = vmatpush1.msra.mxu0 0.0
      %616 = vmatprep.subr.mxu0 0.0
      %617 = vmatpush1.msra.mxu0 0.0
      %618 = vmatprep.subr.mxu0 0.0
      %619 = vmatpush1.msra.mxu0 0.0
      %620 = vmatprep.subr.mxu0 0.0
      %621 = vmatpush1.msra.mxu0 0.0
      %622 = vmatprep.subr.mxu0 0.0
      %623 = vmatpush1.msra.mxu0 0.0
      %624 = vmatprep.subr.mxu0 0.0
      %625 = vmatpush1.msra.mxu0 0.0
      %626 = vmatprep.subr.mxu0 0.0
      %627 = vmatpush1.msra.mxu0 0.0
      %628 = vmatprep.subr.mxu0 0.0
      %629 = vmatpush1.msra.mxu0 0.0
      %630 = vmatprep.subr.mxu0 0.0
      %631 = vmatpush1.msra.mxu0 0.0
      %632 = vmatprep.subr.mxu0 0.0
      %633 = vmatpush1.msra.mxu0 0.0
      %634 = vmatprep.subr.mxu0 0.0
      %635 = vmatpush1.msra.mxu0 0.0
      %636 = vmatprep.subr.mxu0 0.0
      %637 = vmatpush1.msra.mxu0 0.0
      %638 = vmatprep.subr.mxu0 0.0
      %639 = vmatpush1.msra.mxu0 0.0
      %640 = vmatprep.subr.mxu0 0.0
      %641 = vmatpush1.msra.mxu0 0.0
      %642 = vmatprep.subr.mxu0 0.0
      %643 = vmatpush1.msra.mxu0 0.0
      %644 = vmatprep.subr.mxu0 0.0
      %645 = vmatpush1.msra.mxu0 0.0
      %646 = vmatprep.subr.mxu0 0.0
      %647 = vmatpush1.msra.mxu0 0.0
      %648 = vmatprep.subr.mxu0 0.0
      %649 = vmatpush1.msra.mxu0 0.0
      %650 = vmatprep.subr.mxu0 0.0
      %651 = vmatpush1.msra.mxu0 0.0
      %652 = vmatprep.subr.mxu0 0.0
      %653 = vmatpush1.msra.mxu0 0.0
      %654 = vmatprep.subr.mxu0 0.0
      %655 = vmatpush1.msra.mxu0 0.0
      %656 = vmatprep.subr.mxu0 0.0
      %657 = vmatpush1.msra.mxu0 0.0
      %658 = vmatprep.subr.mxu0 0.0
      %659 = vmatpush1.msra.mxu0 0.0
      %660 = vmatprep.subr.mxu0 0.0
      %661 = vmatpush1.msra.mxu0 0.0
      %662 = vmatprep.subr.mxu0 0.0
      %663 = vmatpush1.msra.mxu0 0.0
      %664 = vmatprep.subr.mxu0 0.0
      %665 = vmatpush1.msra.mxu0 0.0
      %666 = vmatprep.subr.mxu0 0.0
      %667 = vmatpush1.msra.mxu0 0.0
      %668 = vmatprep.subr.mxu0 0.0
      %669 = vmatpush1.msra.mxu0 0.0
      %670 = vmatprep.subr.mxu0 0.0
      %671 = vmatpush1.msra.mxu0 0.0
      %672 = vmatprep.subr.mxu0 0.0
      %673 = vmatpush1.msra.mxu0 0.0
      %674 = vmatprep.subr.mxu0 0.0
      %675 = vmatpush1.msra.mxu0 0.0
      %676 = vmatprep.mubr.f32.mxu0 0.0
      %677 = vmatmul.mubr.f32.gmra.mrb[0].mxu0 %v607
      %v678 = vpop.f32.mrb[0].mxu0
      %v679 = vadd.f32 0.0, %v678
      %v680 = vpop.f32.mrb[0].mxu0
      %681 = vmatprep.mubr.f32.mxu0 0.0
      %682 = vmatmul.mubr.f32.gmra.mrb[0].mxu0 %v610
      %v683 = vpop.f32.mrb[0].mxu0
      %v684 = vadd.f32 0.0, %v683
      %v685 = vpop.f32.mrb[0].mxu0
      %686 = vdwg.mxu0
      %v687 = vadd.f32 %v600, %v679
      %v688 = vadd.f32 %v601, %v684
      %v689 = vld [vmem:[%s165 + $0x6] sm:$0xff]
      %v690 = vld [vmem:[%s165 + $0xe] sm:$0xff]
      %s691 = scalar_lea.vmem %s1, 48
      %v692 = vld [vmem:[%s691] sm:$0xff]
      %v694 = vsel %vm178, %v689, 0
      %v697 = vsel %vm178, %v690, 0
      %699 = vmatprep.subr.mxu0 0.0
      %700 = vmatpush1.msra.mxu0 %v692
      %701 = vmatprep.subr.mxu0 0.0
      %702 = vmatpush1.msra.mxu0 0.0
      %703 = vmatprep.subr.mxu0 0.0
      %704 = vmatpush1.msra.mxu0 0.0
      %705 = vmatprep.subr.mxu0 0.0
      %706 = vmatpush1.msra.mxu0 0.0
      %707 = vmatprep.subr.mxu0 0.0
      %708 = vmatpush1.msra.mxu0 0.0
      %709 = vmatprep.subr.mxu0 0.0
      %710 = vmatpush1.msra.mxu0 0.0
      %711 = vmatprep.subr.mxu0 0.0
      %712 = vmatpush1.msra.mxu0 0.0
      %713 = vmatprep.subr.mxu0 0.0
      %714 = vmatpush1.msra.mxu0 0.0
      %715 = vmatprep.subr.mxu0 0.0
      %716 = vmatpush1.msra.mxu0 0.0
      %717 = vmatprep.subr.mxu0 0.0
      %718 = vmatpush1.msra.mxu0 0.0
      %719 = vmatprep.subr.mxu0 0.0
      %720 = vmatpush1.msra.mxu0 0.0
      %721 = vmatprep.subr.mxu0 0.0
      %722 = vmatpush1.msra.mxu0 0.0
      %723 = vmatprep.subr.mxu0 0.0
      %724 = vmatpush1.msra.mxu0 0.0
      %725 = vmatprep.subr.mxu0 0.0
      %726 = vmatpush1.msra.mxu0 0.0
      %727 = vmatprep.subr.mxu0 0.0
      %728 = vmatpush1.msra.mxu0 0.0
      %729 = vmatprep.subr.mxu0 0.0
      %730 = vmatpush1.msra.mxu0 0.0
      %731 = vmatprep.subr.mxu0 0.0
      %732 = vmatpush1.msra.mxu0 0.0
      %733 = vmatprep.subr.mxu0 0.0
      %734 = vmatpush1.msra.mxu0 0.0
      %735 = vmatprep.subr.mxu0 0.0
      %736 = vmatpush1.msra.mxu0 0.0
      %737 = vmatprep.subr.mxu0 0.0
      %738 = vmatpush1.msra.mxu0 0.0
      %739 = vmatprep.subr.mxu0 0.0
      %740 = vmatpush1.msra.mxu0 0.0
      %741 = vmatprep.subr.mxu0 0.0
      %742 = vmatpush1.msra.mxu0 0.0
      %743 = vmatprep.subr.mxu0 0.0
      %744 = vmatpush1.msra.mxu0 0.0
      %745 = vmatprep.subr.mxu0 0.0
      %746 = vmatpush1.msra.mxu0 0.0
      %747 = vmatprep.subr.mxu0 0.0
      %748 = vmatpush1.msra.mxu0 0.0
      %749 = vmatprep.subr.mxu0 0.0
      %750 = vmatpush1.msra.mxu0 0.0
      %751 = vmatprep.subr.mxu0 0.0
      %752 = vmatpush1.msra.mxu0 0.0
      %753 = vmatprep.subr.mxu0 0.0
      %754 = vmatpush1.msra.mxu0 0.0
      %755 = vmatprep.subr.mxu0 0.0
      %756 = vmatpush1.msra.mxu0 0.0
      %757 = vmatprep.subr.mxu0 0.0
      %758 = vmatpush1.msra.mxu0 0.0
      %759 = vmatprep.subr.mxu0 0.0
      %760 = vmatpush1.msra.mxu0 0.0
      %761 = vmatprep.subr.mxu0 0.0
      %762 = vmatpush1.msra.mxu0 0.0
      %763 = vmatprep.mubr.f32.mxu0 0.0
      %764 = vmatmul.mubr.f32.gmra.mrb[0].mxu0 %v694
      %v765 = vpop.f32.mrb[0].mxu0
      %v766 = vadd.f32 0.0, %v765
      %v767 = vpop.f32.mrb[0].mxu0
      %768 = vmatprep.mubr.f32.mxu0 0.0
      %769 = vmatmul.mubr.f32.gmra.mrb[0].mxu0 %v697
      %v770 = vpop.f32.mrb[0].mxu0
      %v771 = vadd.f32 0.0, %v770
      %v772 = vpop.f32.mrb[0].mxu0
      %773 = vdwg.mxu0
      %v774 = vadd.f32 %v687, %v766
      %v775 = vadd.f32 %v688, %v771
      %v776 = vld [vmem:[%s2] sm:$0x1]
      %v778 = vlaneseq
      %v779 = vshrl.u32 %v778, 7
      %v780 = vsub.s32 0, %v779
      %v781 = vrot.slane %v776, %v780
      %v783 = vadd.f32 %v774, %v781
      %v784 = vadd.f32 %v775, %v781
      %v785 = vmax.f32 %v783, 0.0
      %v786 = vmax.f32 %v784, 0.0
      %787 = vst.msk [vmem:[%s170] sm:$0xff] %vm178, %v785
      %788 = vst.msk [vmem:[%s170 + $0x8] sm:$0xff] %vm178, %v786
      %p789 = scmp.lt.s32.totalorder %s14, 1
      %s790 = scalar_select %p789, %s14, 1
      %s791 = smul.addr %s790, 2
      %s792 = smul.addr %s791, 8
      %s793 = scalar_lea.vmem %s3, %s792
      // Predicated region
      $region33: #{tpu_custom_call.1} parent=31 // pred_check
        %p794 = pneg %p100
      $region34: #{tpu_custom_call.1} parent=31 // pred_check_branch
        %796 = sbr.rel (%p794) target = $region36
      $region35: #{tpu_custom_call.1} parent=31 // pred_region
        _
      $region36: #{tpu_custom_call.1} parent=31 // pred_fallthru
        _
    $region32: #{tpu_custom_call.1} parent=5 // pred_fallthru
      _
    %p797 = scmp.le.s32.totalorder 2, %s9
    // Predicated region
    $region37: #{tpu_custom_call.1} parent=5 // pred_check
      %p798 = pneg %p797
    $region38: #{tpu_custom_call.1} parent=5 // pred_check_branch
      %800 = sbr.rel (%p798) target = $region40
    $region39: #{tpu_custom_call.1} parent=5 // pred_region
      %s801 = ssub.s32 %s9, 2
      // Predicated region
      $region41: #{tpu_custom_call.1} parent=39 // pred_check
        %p802 = pneg %p106
      $region42: #{tpu_custom_call.1} parent=39 // pred_check_branch
        %804 = sbr.rel (%p802) target = $region44
      $region43: #{tpu_custom_call.1} parent=39 // pred_region
        %p805 = scmp.lt.s32.totalorder %s15, 1
        %s806 = scalar_select %p805, %s15, 1
        %s807 = smul.addr %s806, 2
        %s808 = smul.addr %s807, 8
        %s809 = scalar_lea.vmem %s3, %s808
      $region44: #{tpu_custom_call.1} parent=39 // pred_fallthru
        _
    $region40: #{tpu_custom_call.1} parent=5 // pred_fallthru
      _
  $region6: #{tpu_custom_call.1} parent=0 // loop_footer
    %s13 = sadd.s32 1, %s9
  $region7: #{tpu_custom_call.1} parent=0 // loop_footer_branch
    %8 = sbr.rel target = $region3
  $region8: #{tpu_custom_call.1} parent=0 // loop_exit
    _

</llo_original>
